<compile_context>
chip_gen: v7x
topology: tpu7x:2x2x1
jax: 0.10.0
libtpu: 0.0.40
codegen_flags: <defaults>
</compile_context>

<pallas_src>
import math

import jax
import jax.numpy as jnp
from jax.experimental import pallas as pl
from jax.experimental.pallas import tpu as pltpu

_MIB = 1024 * 1024


# ----------------------------------------------------------------------------
# Buffer construction — mirrors PositionalEncoding.__init__ exactly
# ----------------------------------------------------------------------------
def make_positional_encoding(d_model: int, max_len: int = 5) -> jnp.ndarray:
    """(1, max_len, d_model) sinusoidal positional-encoding buffer."""
    pe = jnp.zeros((max_len, d_model), dtype=jnp.float32)
    position = jnp.arange(0, max_len, dtype=jnp.float32)[:, None]            # (L, 1)
    div_term = jnp.exp(
        jnp.arange(0, d_model, 2, dtype=jnp.float32) * (-math.log(10000.0) / d_model)
    )                                                                         # (ceil(D/2),)
    pos_div_term = position * div_term                                        # (L, ceil(D/2))
    pe = pe.at[:, 0::2].set(jnp.sin(pos_div_term[:, : (d_model + 2) // 2]))
    pe = pe.at[:, 1::2].set(jnp.cos(pos_div_term[:, : d_model // 2]))
    return pe[None, :, :]


# ----------------------------------------------------------------------------
# Pallas kernel: elementwise add, pe broadcast over the (leading) batch axis
# ----------------------------------------------------------------------------
def _add_pe_kernel(x_ref, pe_ref, o_ref):
    # pe block has a leading 1 on the batch axis; broadcasting handles both the
    # 2-D (tb, tc) and 3-D (tb, tS, D) block layouts.
    o_ref[...] = x_ref[...] + pe_ref[...]


# ----------------------------------------------------------------------------
# Tiling helpers
# ----------------------------------------------------------------------------
def _sublane_multiple(dtype) -> int:
    # f32 -> 8, bf16/f16 -> 16, int8/fp8 -> 32 (packed-sublane native multiples).
    return max(8, 32 // jnp.dtype(dtype).itemsize)


def _tpu_vmem_capacity_bytes() -> int:
    try:
        return int(pltpu.get_tpu_info().vmem_capacity_bytes)
    except Exception:
        return 64 * _MIB  # conservative default (v7x per-core VMEM)


def _round_down(v: int, m: int) -> int:
    return (v // m) * m


def _pick_tile(total: int, mult: int, upper: int) -> int:
    """Tile size for an axis of length `total`: a multiple of `mult`, at most
    `upper`, preferring an exact divisor of `total` (no ragged trailing block)
    as long as that doesn't shrink the tile more than 2x below the target."""
    upper = min(total, max(1, upper))
    if total <= mult or upper >= total:
        return total                      # full extent is always a legal block
    if upper < mult:
        return mult                       # defensive: keep layout aligned
    base = _round_down(upper, mult)
    t = base
    while t >= mult and 2 * t >= base:
        if total % t == 0:
            return t
        t -= mult
    return base


def _choose_tiles_2d(B, N, itemsize, target_bytes, sub_mult):
    """(row, col) tiles for the flattened (B, S*D) layout."""
    tb_unit = min(B, sub_mult)
    # Column (lane) tile: full extent if it fits, else a multiple of 128 that
    # (preferably) divides N exactly.
    col_budget = max(128, target_bytes // (itemsize * tb_unit))
    tc = N if (N <= 128 or N <= col_budget) else _pick_tile(N, 128, col_budget)
    # Row (batch / sublane) tile: full batch if it fits, else a multiple of the
    # dtype-native sublane count.
    row_budget = max(1, target_bytes // (itemsize * tc))
    tb = B if (B <= sub_mult or B <= row_budget) else _pick_tile(B, sub_mult, row_budget)
    # Guarantee >= 2 grid steps on large inputs so both v7x TensorCores get work.
    if pl.cdiv(N, tc) * pl.cdiv(B, tb) == 1 and B * N * itemsize > 4 * _MIB:
        if N >= 256:
            tc = _pick_tile(N, 128, max(128, pl.cdiv(N, 2)))
        elif B >= 2 * sub_mult:
            tb = _pick_tile(B, sub_mult, pl.cdiv(B, 2))
        elif B >= 2:
            tb = pl.cdiv(B, 2)
    return tb, tc


def _choose_tiles_3d(B, S, D, itemsize, target_bytes, sub_mult):
    """(batch, seq) tiles for the 3-D (B, S, D) layout (D is the lane dim)."""
    slab_bytes = S * D * itemsize  # one full batch row
    if slab_bytes <= target_bytes:
        tS = S
        tb = max(1, min(B, target_bytes // slab_bytes))
    else:
        tb = 1
        row_budget = max(sub_mult, target_bytes // (D * itemsize))
        tS = _pick_tile(S, sub_mult, row_budget)
    # Guarantee >= 2 grid steps on large inputs (v7x has two TensorCores).
    if pl.cdiv(S, tS) * pl.cdiv(B, tb) == 1 and B * S * D * itemsize > 4 * _MIB:
        if B >= 2:
            tb = pl.cdiv(B, 2)
        elif S > sub_mult:
            tS = _pick_tile(S, sub_mult, max(sub_mult, pl.cdiv(S, 2)))
    return tb, tS


# ----------------------------------------------------------------------------
# Forward
# ----------------------------------------------------------------------------
def positional_encoding_forward(
    x: jnp.ndarray,
    pe: jnp.ndarray,
    *,
    target_block_bytes: int | None = None,
    donate_x: bool = False,
) -> jnp.ndarray:
    """Computes x + pe[:, :x.shape[1], :] (dropout p=0.0 is the identity).

    x : (B, S, D), pe : (1, max_len, D) with S <= max_len.
    """
    B, S, D = x.shape
    max_len = pe.shape[1]
    assert S <= max_len, f"seq_len {S} exceeds positional-encoding max_len {max_len}"

    dtype = x.dtype
    itemsize = jnp.dtype(dtype).itemsize
    sub_mult = _sublane_multiple(dtype)

    vmem_phys = _tpu_vmem_capacity_bytes()
    if target_block_bytes is None:
        # ~4 MiB blocks on v7x (64 MiB VMEM), ~8 MiB on v5e/v6e (128 MiB VMEM).
        target_block_bytes = int(max(2 * _MIB, min(8 * _MIB, vmem_phys // 16)))

    # Glue (plain JAX): slice pe to the sequence length and match x's dtype.
    pe_sliced = pe[:, :S, :].astype(dtype)

    # Layout choice: keep 3-D blocks (seq on sublanes, D on lanes) when D is
    # already lane-dense; otherwise flatten (S, D) -> S*D for a big lane dim.
    use_3d = (D % 128 == 0) and (min(S, sub_mult) * D * itemsize <= 2 * target_block_bytes)

    if use_3d:
        tb, tS = _choose_tiles_3d(B, S, D, itemsize, target_block_bytes, sub_mult)
        grid = (pl.cdiv(S, tS), pl.cdiv(B, tb))         # seq outer, batch inner
        in_specs = [
            pl.BlockSpec((tb, tS, D), lambda s, b: (b, s, 0)),   # x tile
            pl.BlockSpec((1, tS, D), lambda s, b: (0, s, 0)),    # pe tile (resident over b)
        ]
        out_specs = pl.BlockSpec((tb, tS, D), lambda s, b: (b, s, 0))
        x_in, pe_in = x, pe_sliced
        out_shape = jax.ShapeDtypeStruct((B, S, D), dtype)
        block_bytes = tb * tS * D * itemsize
        pe_block_bytes = tS * D * itemsize
    else:
        N = S * D
        tb, tc = _choose_tiles_2d(B, N, itemsize, target_block_bytes, sub_mult)
        grid = (pl.cdiv(N, tc), pl.cdiv(B, tb))          # cols outer, batch inner
        in_specs = [
            pl.BlockSpec((tb, tc), lambda c, b: (b, c)),         # x tile
            pl.BlockSpec((1, tc), lambda c, b: (0, c)),          # pe tile (resident over b)
        ]
        out_specs = pl.BlockSpec((tb, tc), lambda c, b: (b, c))
        x_in, pe_in = x.reshape(B, N), pe_sliced.reshape(1, N)
        out_shape = jax.ShapeDtypeStruct((B, N), dtype)
        block_bytes = tb * tc * itemsize
        pe_block_bytes = tc * itemsize

    # VMEM budget: double-buffered x & out blocks + (conservatively) the pe block.
    vmem_needed = 2 * (2 * block_bytes + pe_block_bytes)
    vmem_limit = int(min(int(0.6 * vmem_phys), max(32 * _MIB, 2 * vmem_needed)))
    vmem_limit = int(min(max(vmem_limit, vmem_needed + 2 * _MIB), int(0.9 * vmem_phys)))

    # Pure HBM-streaming op: read x, read pe once, write out.
    cost = pl.CostEstimate(
        flops=B * S * D,
        transcendentals=0,
        bytes_accessed=(2 * B * S * D + S * D) * itemsize,
    )

    out = pl.pallas_call(
        _add_pe_kernel,
        out_shape=out_shape,
        grid_spec=pltpu.PrefetchScalarGridSpec(
            num_scalar_prefetch=0,
            grid=grid,
            in_specs=in_specs,
            out_specs=out_specs,
        ),
        compiler_params=pltpu.CompilerParams(
            dimension_semantics=("parallel", "parallel"),
            vmem_limit_bytes=vmem_limit,
        ),
        cost_estimate=cost,
        input_output_aliases=({0: 0} if donate_x else {}),
    )(x_in, pe_in)

    return out.reshape(B, S, D)
    # TODO(synk): for dropout p>0, fuse pltpu.prng_seed/prng_random_bits masking here;
    # the module default p=0.0 makes dropout the identity, so no RNG is emitted.


# ----------------------------------------------------------------------------
# Demo / self-test
# ----------------------------------------------------------------------------
if __name__ == "__main__":
    # Test 1: shapes consistent with the module defaults (max_len=5).
    d_model, max_len, batch, seq = 32, 5, 2, 4
    x = jax.random.normal(jax.random.PRNGKey(0), (batch, seq, d_model), dtype=jnp.float32)
    pe = make_positional_encoding(d_model, max_len)
    out = jax.block_until_ready(positional_encoding_forward(x, pe))
    ref = x + pe[:, :seq, :]
    assert out.shape == (batch, seq, d_model)
    assert jnp.allclose(out, ref, atol=1e-6, rtol=1e-6), "mismatch vs reference (test 1)"

    # Test 2: 2-D flattened path with a forced small block target — exercises
    # divisor-aligned column tiling, sublane-aligned batch tiling and pe residency.
    d2, len2, b2, s2 = 96, 64, 16, 48
    x2 = jax.random.normal(jax.random.PRNGKey(0), (b2, s2, d2), dtype=jnp.float32)
    pe2 = make_positional_encoding(d2, len2)
    out2 = jax.block_until_ready(
        positional_encoding_forward(x2, pe2, target_block_bytes=8192)
    )
    ref2 = x2 + pe2[:, :s2, :]
    assert jnp.allclose(out2, ref2, atol=1e-6, rtol=1e-6), "mismatch vs reference (test 2)"

    # Test 3: 3-D lane-dense path (D % 128 == 0) with seq tiling on the sublane axis.
    d3, len3, b3, s3 = 128, 64, 2, 40
    x3 = jax.random.normal(jax.random.PRNGKey(0), (b3, s3, d3), dtype=jnp.float32)
    pe3 = make_positional_encoding(d3, len3)
    out3 = jax.block_until_ready(
        positional_encoding_forward(x3, pe3, target_block_bytes=8192)
    )
    ref3 = x3 + pe3[:, :s3, :]
    assert jnp.allclose(out3, ref3, atol=1e-6, rtol=1e-6), "mismatch vs reference (test 3)"

    # Test 4: bf16 input (dtype-aware sublane multiple, pe cast in the wrapper).
    d4, len4, b4, s4 = 128, 40, 4, 32
    x4 = jax.random.normal(jax.random.PRNGKey(0), (b4, s4, d4), dtype=jnp.bfloat16)
    pe4 = make_positional_encoding(d4, len4)
    out4 = jax.block_until_ready(positional_encoding_forward(x4, pe4))
    ref4 = x4 + pe4[:, :s4, :].astype(jnp.bfloat16)
    assert jnp.allclose(out4.astype(jnp.float32), ref4.astype(jnp.float32),
                        atol=2e-2, rtol=2e-2), "mismatch vs reference (test 4)"

    print("KERNEL_OK")
</pallas_src>

<mosaic_0001>
module attributes {stable_mosaic.version = 11 : i64} {
  func.func @_add_pe_kernel(%arg0: i32, %arg1: i32, %arg2: memref<2x128xf32, #tpu.memory_space<vmem>>, %arg3: memref<1x128xf32, #tpu.memory_space<vmem>>, %arg4: memref<2x128xf32, #tpu.memory_space<vmem>>) attributes {dimension_semantics = [#tpu.dimension_semantics<parallel>, #tpu.dimension_semantics<parallel>], iteration_bounds = array<i64: 1, 1>, scalar_prefetch = 0 : i64, scratch_operands = 0 : i64, tpu.core_type = #tpu.core_type<tc>, window_params = [{transform_indices = @transform_0, window_bounds = array<i64: 2, 128>}, {transform_indices = @transform_1, window_bounds = array<i64: 1, 128>}, {transform_indices = @transform_2, window_bounds = array<i64: 2, 128>}]} {
    %c0 = arith.constant 0 : index
    %c0_0 = arith.constant 0 : index
    %0 = vector.load %arg2[%c0, %c0_0] : memref<2x128xf32, #tpu.memory_space<vmem>>, vector<2x128xf32>
    %c0_1 = arith.constant 0 : index
    %c0_2 = arith.constant 0 : index
    %1 = vector.load %arg3[%c0_1, %c0_2] : memref<1x128xf32, #tpu.memory_space<vmem>>, vector<1x128xf32>
    %2 = vector.broadcast %1 : vector<1x128xf32> to vector<2x128xf32>
    %3 = arith.addf %0, %2 : vector<2x128xf32>
    %c0_3 = arith.constant 0 : index
    %c0_4 = arith.constant 0 : index
    %4 = vector.load %arg4[%c0_3, %c0_4] : memref<2x128xf32, #tpu.memory_space<vmem>>, vector<2x128xf32>
    tpu.vector_store %arg4[%c0_3, %c0_4], %3 {strides = array<i32>} : memref<2x128xf32, #tpu.memory_space<vmem>>, vector<2x128xf32>,
    return
  }
  func.func @transform_0(%arg0: i32, %arg1: i32) -> (i32, i32) {
    %c0_i32 = arith.constant 0 : i32
    return %arg1, %arg0 : i32, i32
  }
  func.func @transform_1(%arg0: i32, %arg1: i32) -> (i32, i32) {
    %c0_i32 = arith.constant 0 : i32
    %c0_i32_0 = arith.constant 0 : i32
    return %c0_i32, %arg0 : i32, i32
  }
  func.func @transform_2(%arg0: i32, %arg1: i32) -> (i32, i32) {
    %c0_i32 = arith.constant 0 : i32
    return %arg1, %arg0 : i32, i32
  }
}

</mosaic_0001>

<llo_original>
// kernel: tpu_custom_call.1
$region0: #{tpu_custom_call.1}
  #allocation0 [shape = 'u32[]', space=smem, size = 0x4, offset = 0x4, fixed_abs, tag = 'smem constant byte address 0x4 - core index']
  #allocation1 [shape = 'u32[144,128]{1,0:T(1,128)}', space=vmem, size = 0x12000, scoped, tag = 'internal scratch']
  %s0 = inlined_call_operand.hbm [shape: f32[2,128], index: 0, kind: input, shape index: {}]
  %s1 = inlined_call_operand.vmem [shape: f32[1,128], index: 1, kind: input, shape index: {}]
  %s2 = inlined_call_operand.hbm [shape: f32[2,128], index: 2, kind: output, shape index: {}]
  %s3 = sld [smem:[#allocation0]]
  $region22: #{tpu_custom_call.1} parent=0
    _
  %s5 = ssub.s32 1, %s3
  %s6 = scalar_select 0, %s5, %s3
  $region1: #{tpu_custom_call.1} parent=0
    #allocation2 [shape = 'u8[1024]{0}', space=vmem, size = 0x400, scoped, tag = 'input window, operand 0, single buffered']
    #allocation3 [shape = 's32[1]{0}', space=sflag, size = 0x4, scoped, tag = 'scoped memory for tpu_custom_call.1']
    #allocation4 [shape = 's32[1]{0}', space=sflag, size = 0x4, scoped, tag = 'scoped memory for tpu_custom_call.1']
    #allocation5 [shape = 'u8[1024]{0}', space=vmem, size = 0x400, scoped, tag = 'output window, operand 0, single buffered']
    %7 = vsyncpa [#allocation3], 0
    %8 = vsyncpa [#allocation4], 0
    // Predicated region
    $region2: #{tpu_custom_call.1} parent=1 // pred_check
      _
    $region3: #{tpu_custom_call.1} parent=1 // pred_check_branch
      %10 = sbr.rel (0) target = $region5
    $region4: #{tpu_custom_call.1} parent=1 // pred_region
      %s12 = ssub.s32 32, 32
      %13 = vsyncadd [#allocation3], %s12
      %s15 = sshll.u32 [#allocation2], 4
      %s16 = int_to_ptr.vmem [resolvable:$true] %s15
      %18 = dma.hbm_to_vmem [thread:$0]  %s0, 32, %s16, [#allocation3]
    $region5: #{tpu_custom_call.1} parent=1 // pred_fallthru
      _
    // Predicated region
    $region6: #{tpu_custom_call.1} parent=1 // pred_check
      _
    $region7: #{tpu_custom_call.1} parent=1 // pred_check_branch
      %20 = sbr.rel (0) target = $region9
    $region8: #{tpu_custom_call.1} parent=1 // pred_region
      _
    $region9: #{tpu_custom_call.1} parent=1 // pred_fallthru
      _
    // Predicated region
    $region10: #{tpu_custom_call.1} parent=1 // pred_check
      _
    $region11: #{tpu_custom_call.1} parent=1 // pred_check_branch
      %22 = sbr.rel (0) target = $region13
    $region12: #{tpu_custom_call.1} parent=1 // pred_region
      %23 = dma.done [#allocation3], 32
    $region13: #{tpu_custom_call.1} parent=1 // pred_fallthru
      _
    %v24 = vld [vmem:[#allocation2] sm:$0x3]
    %v25 = vld [vmem:[%s1] sm:$0x1]
    %v27 = vlaneseq
    %v28 = vshrl.u32 %v27, 7
    %v29 = vsub.s32 0, %v28
    %v30 = vrot.slane %v25, %v29
    %v32 = vadd.f32 %v24, %v30
    %33 = vst [vmem:[#allocation5] sm:$0x3] %v32
    // Predicated region
    $region14: #{tpu_custom_call.1} parent=1 // pred_check
      _
    $region15: #{tpu_custom_call.1} parent=1 // pred_check_branch
      %35 = sbr.rel (0) target = $region17
    $region16: #{tpu_custom_call.1} parent=1 // pred_region
      %s37 = ssub.s32 32, 32
      %38 = vsyncadd [#allocation4], %s37
      %s40 = sshll.u32 [#allocation5], 4
      %s41 = int_to_ptr.vmem [resolvable:$true] %s40
      %43 = dma.vmem_to_hbm [thread:$0]  %s41, 32, %s2, [#allocation4]
    $region17: #{tpu_custom_call.1} parent=1 // pred_fallthru
      _
    // Predicated region
    $region18: #{tpu_custom_call.1} parent=1 // pred_check
      _
    $region19: #{tpu_custom_call.1} parent=1 // pred_check_branch
      %45 = sbr.rel (0) target = $region21
    $region20: #{tpu_custom_call.1} parent=1 // pred_region
      %46 = dma.done [#allocation4], 32
    $region21: #{tpu_custom_call.1} parent=1 // pred_fallthru
      _
    %47 = vsyncpa [#allocation3], 1
    %48 = vsyncpa [#allocation4], 1

</llo_original>
